<compile_context>
chip_gen: v7x
topology: tpu7x:2x2x1
jax: 0.10.0
libtpu: 0.0.40
codegen_flags: <defaults>
</compile_context>

<pallas_src>
import functools

import jax
import jax.numpy as jnp
from jax.experimental import pallas as pl
from jax.experimental.pallas import tpu as pltpu


def _round_up(a, b):
    return (a + b - 1) // b * b


def _ncm_kernel(x_ref, c2_ref, row_sq_ref, off_ref, out_ref):
    # x_ref:      (TN, TD)  input rows (native dtype)
    # c2_ref:     (TK, TD)  2 * centroid rows (native dtype)
    # row_sq_ref: (TN, 1)   ||x_n||^2                (f32, precomputed in wrapper)
    # off_ref:    (1,  TK)  ||C_k||^2 + bias_k       (f32, precomputed in wrapper)
    # out_ref:    (TN, TK)  f32 output tile; doubles as the accumulator across D.
    l = pl.program_id(2)

    # 2 * x @ C^T on the MXU (centroids pre-scaled by 2); f32 accumulation.
    partial = jax.lax.dot_general(
        x_ref[...], c2_ref[...], (((1,), (1,)), ((), ())),
        preferred_element_type=jnp.float32,
    )

    @pl.when(l == 0)
    def _():
        out_ref[...] = partial

    @pl.when(l > 0)
    def _():
        out_ref[...] += partial

    @pl.when(l == pl.num_programs(2) - 1)
    def _():
        out_ref[...] = out_ref[...] - row_sq_ref[...] - off_ref[...]


def ncm_output_forward(x, weight, bias, *, tile_n=512, tile_k=512, tile_d=512):
    """x: (N, indim), weight: (outdim, indim), bias: (outdim,) -> (N, outdim) f32."""
    n, d = x.shape
    k = weight.shape[0]

    # Faithful to torch: weight.transpose(0,1).reshape(outdim, indim) -> logical
    # row-major reflatten of W^T as the centroid matrix.
    centroids = jnp.reshape(weight.T, (k, d))

    # Tiny wrapper-side precomputations (one cheap pass each):
    #   offset_k = ||C_k||^2 + b_k            (1, K)  f32
    #   row_sq_n = ||x_n||^2                  (N, 1)  f32
    #   c2       = 2 * C  (native dtype; exact power-of-two scale)
    c_sq = jnp.sum(centroids.astype(jnp.float32) ** 2, axis=1)
    offset = (c_sq + bias.astype(jnp.float32)).reshape(1, k)
    row_sq = jnp.sum(x.astype(jnp.float32) ** 2, axis=1, keepdims=True)
    c2 = centroids * jnp.asarray(2, dtype=centroids.dtype)

    # Tile selection: MXU/lane aligned (last dims multiples of 128, sublane mult of 8).
    td = _round_up(min(tile_d, d), 128)
    tk = _round_up(min(tile_k, k), 128)
    tn = _round_up(min(tile_n, n), 8)
    d_pad = _round_up(d, td)
    k_pad = _round_up(k, tk)
    n_pad = _round_up(n, tn)

    # v7x megacore: make sure at least one "parallel" axis has >= 2 blocks.
    if (n_pad // tn) * (k_pad // tk) < 2 and n_pad >= 16:
        tn = _round_up(n_pad // 2, 8)
        n_pad = _round_up(n, tn)

    # Zero-padding is exact: padded D contributes 0 to dot and norms; padded N/K rows
    # produce finite garbage that is sliced off below.
    if n_pad != n or d_pad != d:
        x = jnp.pad(x, ((0, n_pad - n), (0, d_pad - d)))
    if k_pad != k or d_pad != d:
        c2 = jnp.pad(c2, ((0, k_pad - k), (0, d_pad - d)))
    if k_pad != k:
        offset = jnp.pad(offset, ((0, 0), (0, k_pad - k)))
    if n_pad != n:
        row_sq = jnp.pad(row_sq, ((0, n_pad - n), (0, 0)))

    grid = (n_pad // tn, k_pad // tk, d_pad // td)

    x_bytes = jnp.dtype(x.dtype).itemsize
    c_bytes = jnp.dtype(c2.dtype).itemsize
    # Double-buffered block footprint estimate (+ small side inputs), with headroom.
    est_vmem = (2 * (tn * td * x_bytes + tk * td * c_bytes + tn * tk * 4)
                + 2 * (tn * 128 + 8 * tk) * 4)
    vmem_limit = int(min(64 * 1024 * 1024, max(32 * 1024 * 1024, 2 * est_vmem)))

    cost = pl.CostEstimate(
        flops=2 * n_pad * k_pad * d_pad,
        transcendentals=0,
        bytes_accessed=(n_pad * d_pad * x_bytes
                        + k_pad * d_pad * c_bytes
                        + n_pad * k_pad * 4),
    )

    out = pl.pallas_call(
        _ncm_kernel,
        out_shape=jax.ShapeDtypeStruct((n_pad, k_pad), jnp.float32),
        grid_spec=pltpu.PrefetchScalarGridSpec(
            num_scalar_prefetch=0,
            grid=grid,
            in_specs=[
                pl.BlockSpec((tn, td), lambda i, j, l: (i, l)),   # x
                pl.BlockSpec((tk, td), lambda i, j, l: (j, l)),   # 2 * centroids
                pl.BlockSpec((tn, 1), lambda i, j, l: (i, 0)),    # ||x||^2
                pl.BlockSpec((1, tk), lambda i, j, l: (0, j)),    # ||C||^2 + bias
            ],
            out_specs=pl.BlockSpec((tn, tk), lambda i, j, l: (i, j)),
        ),
        compiler_params=pltpu.CompilerParams(
            dimension_semantics=("parallel", "parallel", "arbitrary"),
            vmem_limit_bytes=vmem_limit,
        ),
        cost_estimate=cost,
    )(x, c2, row_sq, offset)

    return out[:n, :k]


if __name__ == "__main__":
    key = jax.random.PRNGKey(0)
    kx, kw, kb = jax.random.split(key, 3)

    # Small, deliberately non-aligned shapes: batch N=64, indim D=96, outdim K=40.
    N, D, K = 64, 96, 40
    x = jax.random.normal(kx, (N, D), dtype=jnp.float32)
    weight = jax.random.normal(kw, (K, D), dtype=jnp.float32) * 0.1
    bias = jax.random.normal(kb, (K,), dtype=jnp.float32) * 0.1

    out = ncm_output_forward(x, weight, bias)
    jax.block_until_ready(out)

    # Pure-JAX reference matching the PyTorch forward exactly.
    centroids = jnp.reshape(weight.T, (K, D))
    ref = -jnp.sum((x[:, None, :] - centroids[None, :, :]) ** 2, axis=-1) - bias[None, :]

    assert out.shape == (N, K)
    assert jnp.allclose(out, ref, atol=1e-2, rtol=1e-4), float(jnp.max(jnp.abs(out - ref)))
    print("KERNEL_OK")
</pallas_src>

<mosaic_0001>
module attributes {stable_mosaic.version = 11 : i64} {
  func.func @_ncm_kernel(%arg0: i32, %arg1: i32, %arg2: i32, %arg3: memref<32x128xf32, #tpu.memory_space<vmem>>, %arg4: memref<128x128xf32, #tpu.memory_space<vmem>>, %arg5: memref<32x1xf32, #tpu.memory_space<vmem>>, %arg6: memref<1x128xf32, #tpu.memory_space<vmem>>, %arg7: memref<32x128xf32, #tpu.memory_space<vmem>>) attributes {dimension_semantics = [#tpu.dimension_semantics<parallel>, #tpu.dimension_semantics<parallel>, #tpu.dimension_semantics<arbitrary>], iteration_bounds = array<i64: 2, 1, 1>, scalar_prefetch = 0 : i64, scratch_operands = 0 : i64, tpu.core_type = #tpu.core_type<tc>, window_params = [{transform_indices = @transform_0, window_bounds = array<i64: 32, 128>}, {transform_indices = @transform_1, window_bounds = array<i64: 128, 128>}, {transform_indices = @transform_2, window_bounds = array<i64: 32, 1>}, {transform_indices = @transform_3, window_bounds = array<i64: 1, 128>}, {transform_indices = @transform_4, window_bounds = array<i64: 32, 128>}]} {
    %c0 = arith.constant 0 : index
    %c0_0 = arith.constant 0 : index
    %0 = vector.load %arg3[%c0, %c0_0] : memref<32x128xf32, #tpu.memory_space<vmem>>, vector<32x128xf32>
    %c0_1 = arith.constant 0 : index
    %c0_2 = arith.constant 0 : index
    %1 = vector.load %arg4[%c0_1, %c0_2] : memref<128x128xf32, #tpu.memory_space<vmem>>, vector<128x128xf32>
    %cst = arith.constant dense<0.000000e+00> : vector<32x128xf32>
    %2 = tpu.matmul %0, %1, %cst {dimension_numbers = #tpu.dot_dimension_numbers<[1], [1], [0], [0], [0, 0, 1, 0], [], []>} : vector<32x128xf32>, vector<128x128xf32>, vector<32x128xf32> -> vector<32x128xf32>
    %c0_i32 = arith.constant 0 : i32
    %3 = arith.cmpi eq, %arg2, %c0_i32 : i32
    %4 = arith.extui %3 : i1 to i32
    %c0_i32_3 = arith.constant 0 : i32
    %5 = arith.cmpi ne, %4, %c0_i32_3 : i32
    scf.if %5 {
      %c0_8 = arith.constant 0 : index
      %c0_9 = arith.constant 0 : index
      %12 = vector.load %arg7[%c0_8, %c0_9] : memref<32x128xf32, #tpu.memory_space<vmem>>, vector<32x128xf32>
      tpu.vector_store %arg7[%c0_8, %c0_9], %2 {strides = array<i32>} : memref<32x128xf32, #tpu.memory_space<vmem>>, vector<32x128xf32>,
    } else {
    }
    %c0_i32_4 = arith.constant 0 : i32
    %6 = arith.cmpi sgt, %arg2, %c0_i32_4 : i32
    %7 = arith.extui %6 : i1 to i32
    %c0_i32_5 = arith.constant 0 : i32
    %8 = arith.cmpi ne, %7, %c0_i32_5 : i32
    scf.if %8 {
      %c0_8 = arith.constant 0 : index
      %c0_9 = arith.constant 0 : index
      %12 = vector.load %arg7[%c0_8, %c0_9] : memref<32x128xf32, #tpu.memory_space<vmem>>, vector<32x128xf32>
      %13 = arith.addf %12, %2 : vector<32x128xf32>
      %c0_10 = arith.constant 0 : index
      %c0_11 = arith.constant 0 : index
      %14 = vector.load %arg7[%c0_10, %c0_11] : memref<32x128xf32, #tpu.memory_space<vmem>>, vector<32x128xf32>
      tpu.vector_store %arg7[%c0_10, %c0_11], %13 {strides = array<i32>} : memref<32x128xf32, #tpu.memory_space<vmem>>, vector<32x128xf32>,
    } else {
    }
    %c0_i32_6 = arith.constant 0 : i32
    %9 = arith.cmpi eq, %arg2, %c0_i32_6 : i32
    %10 = arith.extui %9 : i1 to i32
    %c0_i32_7 = arith.constant 0 : i32
    %11 = arith.cmpi ne, %10, %c0_i32_7 : i32
    scf.if %11 {
      %c0_8 = arith.constant 0 : index
      %c0_9 = arith.constant 0 : index
      %12 = vector.load %arg7[%c0_8, %c0_9] : memref<32x128xf32, #tpu.memory_space<vmem>>, vector<32x128xf32>
      %c0_10 = arith.constant 0 : index
      %c0_11 = arith.constant 0 : index
      %13 = vector.load %arg5[%c0_10, %c0_11] : memref<32x1xf32, #tpu.memory_space<vmem>>, vector<32x1xf32>
      %14 = vector.broadcast %13 : vector<32x1xf32> to vector<32x128xf32>
      %15 = arith.subf %12, %14 : vector<32x128xf32>
      %c0_12 = arith.constant 0 : index
      %c0_13 = arith.constant 0 : index
      %16 = vector.load %arg6[%c0_12, %c0_13] : memref<1x128xf32, #tpu.memory_space<vmem>>, vector<1x128xf32>
      %17 = vector.broadcast %16 : vector<1x128xf32> to vector<32x128xf32>
      %18 = arith.subf %15, %17 : vector<32x128xf32>
      %c0_14 = arith.constant 0 : index
      %c0_15 = arith.constant 0 : index
      %19 = vector.load %arg7[%c0_14, %c0_15] : memref<32x128xf32, #tpu.memory_space<vmem>>, vector<32x128xf32>
      tpu.vector_store %arg7[%c0_14, %c0_15], %18 {strides = array<i32>} : memref<32x128xf32, #tpu.memory_space<vmem>>, vector<32x128xf32>,
    } else {
    }
    return
  }
  func.func @transform_0(%arg0: i32, %arg1: i32, %arg2: i32) -> (i32, i32) {
    %c0_i32 = arith.constant 0 : i32
    return %arg0, %arg2 : i32, i32
  }
  func.func @transform_1(%arg0: i32, %arg1: i32, %arg2: i32) -> (i32, i32) {
    %c0_i32 = arith.constant 0 : i32
    return %arg1, %arg2 : i32, i32
  }
  func.func @transform_2(%arg0: i32, %arg1: i32, %arg2: i32) -> (i32, i32) {
    %c0_i32 = arith.constant 0 : i32
    %c0_i32_0 = arith.constant 0 : i32
    return %arg0, %c0_i32 : i32, i32
  }
  func.func @transform_3(%arg0: i32, %arg1: i32, %arg2: i32) -> (i32, i32) {
    %c0_i32 = arith.constant 0 : i32
    %c0_i32_0 = arith.constant 0 : i32
    return %c0_i32, %arg1 : i32, i32
  }
  func.func @transform_4(%arg0: i32, %arg1: i32, %arg2: i32) -> (i32, i32) {
    %c0_i32 = arith.constant 0 : i32
    return %arg0, %arg1 : i32, i32
  }
}

</mosaic_0001>

<llo_original>
// kernel: tpu_custom_call.1
$region0: #{tpu_custom_call.1}
  #allocation0 [shape = 'u32[]', space=smem, size = 0x4, offset = 0x4, fixed_abs, tag = 'smem constant byte address 0x4 - core index']
  #allocation1 [shape = 'u32[144,128]{1,0:T(1,128)}', space=vmem, size = 0x12000, scoped, tag = 'internal scratch']
  %s0 = inlined_call_operand.vmem [shape: f32[64,128], index: 0, kind: input, shape index: {}]
  %s1 = inlined_call_operand.hbm [shape: f32[128,128], index: 1, kind: input, shape index: {}]
  %s2 = inlined_call_operand.vmem [shape: f32[64,1], index: 2, kind: input, shape index: {}]
  %s3 = inlined_call_operand.vmem [shape: f32[1,128], index: 3, kind: input, shape index: {}]
  %s4 = inlined_call_operand.hbm [shape: f32[64,128], index: 4, kind: output, shape index: {}]
  %s5 = sld [smem:[#allocation0]]
  $region65: #{tpu_custom_call.1} parent=0
    _
  %s7 = ssub.s32 1, %s5
  %s8 = scalar_select 0, %s7, %s5
  $region1: #{tpu_custom_call.1} parent=0
    #allocation2 [shape = 'u8[65536]{0}', space=vmem, size = 0x10000, scoped, tag = 'input window, operand 1, single buffered']
    #allocation3 [shape = 's32[2]{0}', space=sflag, size = 0x8, scoped, tag = 'scoped memory for tpu_custom_call.1']
    #allocation4 [shape = 's32[2]{0}', space=sflag, size = 0x8, scoped, tag = 'scoped memory for tpu_custom_call.1']
    #allocation5 [shape = 'u8[32768]{0}', space=vmem, size = 0x8000, scoped, tag = 'output window, operand 0']
    %9 = vsyncpa [#allocation3], 0
    %10 = vsyncpa [#allocation4], 0
    %s11 = scalar_lea.sflag [#allocation4], 1
    %12 = vsyncpa %s11, 0
    loop: start=0, step=1, limit=4
    $region2: #{tpu_custom_call.1} parent=1 // loop_pre_header
      _
    $region3: #{tpu_custom_call.1} parent=1 // loop_header
      %s14 = sphi 0, %s18
      %p15 = scmp.ge.s32.totalorder %s14, 4
      %s21 = sphi 0, %s40
      %s22 = sphi 0, %s36
      %s23 = sphi 0, %s32
      %s24 = sphi 0, %s21
      %s25 = sphi 0, %s22
      %s26 = sphi 0, %s23
      %s27 = sphi 0, %s24
      %s28 = sphi 0, %s25
      %s29 = sphi 0, %s26
      %s45 = sphi 0, %s47
      %s48 = sphi 0, %s45
      %s49 = sphi 0, %s48
      %s65 = sphi 0, %s49
      %s73 = sphi 0, %s75
      %s76 = sphi 0, %s73
      %s77 = sphi 0, %s76
      %s93 = sphi 0, %s77
      %s99 = sphi 0, %s101
      %s102 = sphi 0, %s99
      %s103 = sphi 0, %s102
      %s119 = sphi 0, %s103
      %s125 = sphi 0, %s127
      %s128 = sphi 0, %s125
      %s129 = sphi 0, %s128
      %s145 = sphi 0, %s129
      %s153 = sphi 0, %s155
      %s156 = sphi 0, %s153
      %s157 = sphi 0, %s156
      %s173 = sphi 0, %s157
    $region4: #{tpu_custom_call.1} parent=1 // loop_header_branch
      %17 = sbr.rel (%p15) target = $region8
    $region5: #{tpu_custom_call.1} parent=1 // loop_body
      %s19 = ssub.s32 %s14, 1
      %s20 = ssub.s32 %s14, 2
      %s30 = sadd.s32 1, %s23
      %p31 = scmp.ge.s32.totalorder %s30, 1
      %s32 = scalar_select %p31, 0, %s30
      %s33 = sadd.s32 1, %s22
      %s34 = scalar_select %p31, %s33, %s22
      %p35 = scmp.ge.s32.totalorder %s34, 1
      %s36 = scalar_select %p35, 0, %s34
      %s37 = sadd.s32 1, %s21
      %s38 = scalar_select %p35, %s37, %s21
      %p39 = scmp.ge.s32.totalorder %s38, 2
      %s40 = scalar_select %p39, 0, %s38
      %s41 = ssub.s32 %s21, %s40
      %s42 = ssub.s32 %s23, %s32
      %s43 = sor.u32 %s41, %s42
      %p44 = scmp.eq.s32.totalorder %s43, 0
      %s46 = sadd.s32 %s45, 1
      %s47 = scalar_select %p44, %s45, %s46
      %p50 = pneg %p44
      %p51 = scmp.eq.s32.totalorder %s14, 1
      %p52 = por %p50, %p51
      %p53 = scmp.ne.s32.totalorder %s45, %s48
      %p54 = scmp.eq.s32.totalorder %s14, 0
      %p55 = por %p53, %p54
      %p56 = scmp.ne.s32.totalorder %s45, %s48
      %p57 = scmp.eq.s32.totalorder %s19, 1
      %p58 = por %p56, %p57
      %p59 = scmp.ne.s32.totalorder %s48, %s49
      %p60 = scmp.eq.s32.totalorder %s19, 0
      %p61 = por %p59, %p60
      %p62 = scmp.ne.s32.totalorder %s48, %s49
      %p63 = scmp.eq.s32.totalorder %s20, 1
      %p64 = por %p62, %p63
      %p66 = scmp.ne.s32.totalorder %s49, %s65
      %p67 = scmp.eq.s32.totalorder %s20, 0
      %p68 = por %p66, %p67
      %s69 = ssub.s32 %s22, %s36
      %s70 = ssub.s32 %s23, %s32
      %s71 = sor.u32 %s69, %s70
      %p72 = scmp.eq.s32.totalorder %s71, 0
      %s74 = sadd.s32 %s73, 1
      %s75 = scalar_select %p72, %s73, %s74
      %p78 = pneg %p72
      %p79 = scmp.eq.s32.totalorder %s14, 1
      %p80 = por %p78, %p79
      %p81 = scmp.ne.s32.totalorder %s73, %s76
      %p82 = scmp.eq.s32.totalorder %s14, 0
      %p83 = por %p81, %p82
      %p84 = scmp.ne.s32.totalorder %s73, %s76
      %p85 = scmp.eq.s32.totalorder %s19, 1
      %p86 = por %p84, %p85
      %p87 = scmp.ne.s32.totalorder %s76, %s77
      %p88 = scmp.eq.s32.totalorder %s19, 0
      %p89 = por %p87, %p88
      %p90 = scmp.ne.s32.totalorder %s76, %s77
      %p91 = scmp.eq.s32.totalorder %s20, 1
      %p92 = por %p90, %p91
      %p94 = scmp.ne.s32.totalorder %s77, %s93
      %p95 = scmp.eq.s32.totalorder %s20, 0
      %p96 = por %p94, %p95
      %s97 = ssub.s32 %s21, %s40
      %p98 = scmp.eq.s32.totalorder %s97, 0
      %s100 = sadd.s32 %s99, 1
      %s101 = scalar_select %p98, %s99, %s100
      %p104 = pneg %p98
      %p105 = scmp.eq.s32.totalorder %s14, 1
      %p106 = por %p104, %p105
      %p107 = scmp.ne.s32.totalorder %s99, %s102
      %p108 = scmp.eq.s32.totalorder %s14, 0
      %p109 = por %p107, %p108
      %p110 = scmp.ne.s32.totalorder %s99, %s102
      %p111 = scmp.eq.s32.totalorder %s19, 1
      %p112 = por %p110, %p111
      %p113 = scmp.ne.s32.totalorder %s102, %s103
      %p114 = scmp.eq.s32.totalorder %s19, 0
      %p115 = por %p113, %p114
      %p116 = scmp.ne.s32.totalorder %s102, %s103
      %p117 = scmp.eq.s32.totalorder %s20, 1
      %p118 = por %p116, %p117
      %p120 = scmp.ne.s32.totalorder %s103, %s119
      %p121 = scmp.eq.s32.totalorder %s20, 0
      %p122 = por %p120, %p121
      %s123 = ssub.s32 %s22, %s36
      %p124 = scmp.eq.s32.totalorder %s123, 0
      %s126 = sadd.s32 %s125, 1
      %s127 = scalar_select %p124, %s125, %s126
      %p130 = pneg %p124
      %p131 = scmp.eq.s32.totalorder %s14, 1
      %p132 = por %p130, %p131
      %p133 = scmp.ne.s32.totalorder %s125, %s128
      %p134 = scmp.eq.s32.totalorder %s14, 0
      %p135 = por %p133, %p134
      %p136 = scmp.ne.s32.totalorder %s125, %s128
      %p137 = scmp.eq.s32.totalorder %s19, 1
      %p138 = por %p136, %p137
      %p139 = scmp.ne.s32.totalorder %s128, %s129
      %p140 = scmp.eq.s32.totalorder %s19, 0
      %p141 = por %p139, %p140
      %p142 = scmp.ne.s32.totalorder %s128, %s129
      %p143 = scmp.eq.s32.totalorder %s20, 1
      %p144 = por %p142, %p143
      %p146 = scmp.ne.s32.totalorder %s129, %s145
      %p147 = scmp.eq.s32.totalorder %s20, 0
      %p148 = por %p146, %p147
      %s149 = ssub.s32 %s21, %s40
      %s150 = ssub.s32 %s22, %s36
      %s151 = sor.u32 %s149, %s150
      %p152 = scmp.eq.s32.totalorder %s151, 0
      %s154 = sadd.s32 %s153, 1
      %s155 = scalar_select %p152, %s153, %s154
      %p158 = pneg %p152
      %p159 = scmp.eq.s32.totalorder %s14, 1
      %p160 = por %p158, %p159
      %p161 = scmp.ne.s32.totalorder %s153, %s156
      %p162 = scmp.eq.s32.totalorder %s14, 0
      %p163 = por %p161, %p162
      %p164 = scmp.ne.s32.totalorder %s153, %s156
      %p165 = scmp.eq.s32.totalorder %s19, 1
      %p166 = por %p164, %p165
      %p167 = scmp.ne.s32.totalorder %s156, %s157
      %p168 = scmp.eq.s32.totalorder %s19, 0
      %p169 = por %p167, %p168
      %p170 = scmp.ne.s32.totalorder %s156, %s157
      %p171 = scmp.eq.s32.totalorder %s20, 1
      %p172 = por %p170, %p171
      %p174 = scmp.ne.s32.totalorder %s157, %s173
      %p175 = scmp.eq.s32.totalorder %s20, 0
      %p176 = por %p174, %p175
      %p177 = scmp.le.s32.totalorder 1, %s14
      %p178 = scmp.lt.s32.totalorder %s14, 3
      %p179 = pnand %p177, %p178
      %p180 = pneg %p179
      // Predicated region
      $region9: #{tpu_custom_call.1} parent=5 // pred_check
        _
      $region10: #{tpu_custom_call.1} parent=5 // pred_check_branch
        %182 = sbr.rel (%p179) target = $region12
      $region11: #{tpu_custom_call.1} parent=5 // pred_region
        %s183 = ssub.s32 %s14, 1
        // Predicated region
        $region13: #{tpu_custom_call.1} parent=11 // pred_check
          %p184 = pneg %p89
        $region14: #{tpu_custom_call.1} parent=11 // pred_check_branch
          %186 = sbr.rel (%p184) target = $region16
        $region15: #{tpu_custom_call.1} parent=11 // pred_region
          %s187 = smul.u32 16, %s25
          %s189 = ssub.s32 2048, 2048
          %190 = vsyncadd [#allocation3], %s189
          %s191 = sadd.s32 %s26, %s187
          %s192 = smul.addr %s191, 128
          %s193 = scalar_lea.hbm %s1, %s192
          %s194 = sshll.u32 [#allocation2], 4
          %s195 = int_to_ptr.vmem [resolvable:$true] %s194
          %200 = dma.hbm_to_vmem [thread:$0]  %s193, 2048, %s195, [#allocation3], 128, 128, 8
        $region16: #{tpu_custom_call.1} parent=11 // pred_fallthru
          _
        // Predicated region
        $region17: #{tpu_custom_call.1} parent=11 // pred_check
          %p201 = pneg %p141
        $region18: #{tpu_custom_call.1} parent=11 // pred_check_branch
          %203 = sbr.rel (%p201) target = $region20
        $region19: #{tpu_custom_call.1} parent=11 // pred_region
          %p204 = scmp.lt.s32.totalorder %s25, 0
          %s205 = scalar_select %p204, %s25, 0
          %s206 = scalar_lea.vmem %s3, %s205
        $region20: #{tpu_custom_call.1} parent=11 // pred_fallthru
          _
      $region12: #{tpu_custom_call.1} parent=5 // pred_fallthru
        _
      %p207 = scmp.lt.s32.totalorder %s14, 2
      // Predicated region
      $region21: #{tpu_custom_call.1} parent=5 // pred_check
        %p208 = pneg %p207
      $region22: #{tpu_custom_call.1} parent=5 // pred_check_branch
        %210 = sbr.rel (%p208) target = $region24
      $region23: #{tpu_custom_call.1} parent=5 // pred_region
        // Predicated region
        $region25: #{tpu_custom_call.1} parent=23 // pred_check
          %p211 = pneg %p55
        $region26: #{tpu_custom_call.1} parent=23 // pred_check_branch
          %213 = sbr.rel (%p211) target = $region28
        $region27: #{tpu_custom_call.1} parent=23 // pred_region
          %s214 = smul.u32 4, %s21
          %p215 = scmp.lt.s32.totalorder %s214, 7
          %s216 = scalar_select %p215, %s214, 7
          %p217 = scmp.lt.s32.totalorder %s23, 0
          %s218 = scalar_select %p217, %s23, 0
          %s219 = sadd.s32 %s218, %s216
          %s220 = smul.addr %s219, 8
          %s221 = scalar_lea.vmem %s0, %s220
          %s222 = smul.u32 4, %s21
        $region28: #{tpu_custom_call.1} parent=23 // pred_fallthru
          _
        // Predicated region
        $region29: #{tpu_custom_call.1} parent=23 // pred_check
          %p223 = pneg %p109
        $region30: #{tpu_custom_call.1} parent=23 // pred_check_branch
          %225 = sbr.rel (%p223) target = $region32
        $region31: #{tpu_custom_call.1} parent=23 // pred_region
          %s226 = smul.u32 4, %s21
          %p227 = scmp.lt.s32.totalorder %s226, 7
          %s228 = scalar_select %p227, %s226, 7
          %s229 = smul.addr %s228, 8
          %s230 = scalar_lea.vmem %s2, %s229
          %s231 = smul.u32 4, %s21
        $region32: #{tpu_custom_call.1} parent=23 // pred_fallthru
          _
      $region24: #{tpu_custom_call.1} parent=5 // pred_fallthru
        _
      %p232 = scmp.le.s32.totalorder 1, %s14
      %p233 = scmp.lt.s32.totalorder %s14, 3
      %p234 = pnand %p232, %p233
      %p235 = pneg %p234
      // Predicated region
      $region33: #{tpu_custom_call.1} parent=5 // pred_check
        _
      $region34: #{tpu_custom_call.1} parent=5 // pred_check_branch
        %237 = sbr.rel (%p234) target = $region36
      $region35: #{tpu_custom_call.1} parent=5 // pred_region
        %s238 = ssub.s32 %s14, 1
        // Predicated region
        $region37: #{tpu_custom_call.1} parent=35 // pred_check
          %p239 = pneg %p89
        $region38: #{tpu_custom_call.1} parent=35 // pred_check_branch
          %241 = sbr.rel (%p239) target = $region40
        $region39: #{tpu_custom_call.1} parent=35 // pred_region
          %242 = dma.done [#allocation3], 2048
        $region40: #{tpu_custom_call.1} parent=35 // pred_fallthru
          _
        %s243 = smul.u32 4, %s24
        %p244 = scmp.lt.s32.totalorder %s243, 7
        %s245 = scalar_select %p244, %s243, 7
        %p246 = scmp.lt.s32.totalorder %s26, 0
        %s247 = scalar_select %p246, %s26, 0
        %s248 = sadd.s32 %s247, %s245
        %s249 = smul.addr %s248, 8
        %s250 = scalar_lea.vmem %s0, %s249
        %p251 = pneg %p61
        %p252 = pneg %p58
        %p253 = pneg %p89
        %p254 = pneg %p86
        %s255 = smul.u32 4, %s24
        %p256 = scmp.lt.s32.totalorder %s255, 7
        %s257 = scalar_select %p256, %s255, 7
        %s258 = smul.addr %s257, 8
        %s259 = scalar_lea.vmem %s2, %s258
        %p260 = pneg %p115
        %p261 = pneg %p112
        %p262 = scmp.lt.s32.totalorder %s25, 0
        %s263 = scalar_select %p262, %s25, 0
        %s264 = scalar_lea.vmem %s3, %s263
        %p265 = pneg %p141
        %p266 = pneg %p138
        %p267 = pneg %p169
        %p268 = pneg %p166
        %s269 = sand.u32 %s156, 1
        %s270 = scalar_lea.sflag [#allocation4], %s269
        %s271 = sand.u32 %s156, 1
        %s272 = smul.addr %s271, 32
        %s273 = scalar_lea.vmem [#allocation5], %s272
        %s274 = smul.u32 4, %s24
        %p275 = scmp.lt.s32.totalorder %s274, 7
        %s276 = scalar_select %p275, %s274, 7
        %p277 = scmp.lt.s32.totalorder %s26, 0
        %s278 = scalar_select %p277, %s26, 0
        %s279 = sadd.s32 %s278, %s276
        %s280 = smul.addr %s279, 8
        %s281 = scalar_lea.vmem %s0, %s280
        %s282 = smul.u32 4, %s24
        %s283 = smul.u32 16, %s25
        %s284 = smul.u32 4, %s24
        %p285 = scmp.lt.s32.totalorder %s284, 7
        %s286 = scalar_select %p285, %s284, 7
        %s287 = smul.addr %s286, 8
        %s288 = scalar_lea.vmem %s2, %s287
        %s289 = smul.u32 4, %s24
        %p290 = scmp.lt.s32.totalorder %s25, 0
        %s291 = scalar_select %p290, %s25, 0
        %s292 = scalar_lea.vmem %s3, %s291
        %s293 = smul.u32 4, %s24
        %v294 = vld [vmem:[%s281] sm:$0xff]
        %v295 = vld [vmem:[%s281 + $0x8] sm:$0xff]
        %v296 = vld [vmem:[%s281 + $0x10] sm:$0xff]
        %v297 = vld [vmem:[%s281 + $0x18] sm:$0xff]
        %v298 = vld [vmem:[#allocation2] sm:$0xff]
        %v299 = vld [vmem:[#allocation2 + $0x8] sm:$0xff]
        %v300 = vld [vmem:[#allocation2 + $0x10] sm:$0xff]
        %v301 = vld [vmem:[#allocation2 + $0x18] sm:$0xff]
        %v302 = vld [vmem:[#allocation2 + $0x20] sm:$0xff]
        %v303 = vld [vmem:[#allocation2 + $0x28] sm:$0xff]
        %v304 = vld [vmem:[#allocation2 + $0x30] sm:$0xff]
        %v305 = vld [vmem:[#allocation2 + $0x38] sm:$0xff]
        %v306 = vld [vmem:[#allocation2 + $0x40] sm:$0xff]
        %v307 = vld [vmem:[#allocation2 + $0x48] sm:$0xff]
        %v308 = vld [vmem:[#allocation2 + $0x50] sm:$0xff]
        %v309 = vld [vmem:[#allocation2 + $0x58] sm:$0xff]
        %v310 = vld [vmem:[#allocation2 + $0x60] sm:$0xff]
        %v311 = vld [vmem:[#allocation2 + $0x68] sm:$0xff]
        %v312 = vld [vmem:[#allocation2 + $0x70] sm:$0xff]
        %v313 = vld [vmem:[#allocation2 + $0x78] sm:$0xff]
        %314 = vmatprep.subr.mxu0 0.0
        %315 = vmatpush1.xpose.msra.mxu0 %v298
        %316 = vmatprep.subr.mxu0 0.0
        %317 = vmatpush1.xpose.msra.mxu0 %v299
        %318 = vmatprep.subr.mxu0 0.0
        %319 = vmatpush1.xpose.msra.mxu0 %v300
        %320 = vmatprep.subr.mxu0 0.0
        %321 = vmatpush1.xpose.msra.mxu0 %v301
        %322 = vmatprep.subr.mxu0 0.0
        %323 = vmatpush1.xpose.msra.mxu0 %v302
        %324 = vmatprep.subr.mxu0 0.0
        %325 = vmatpush1.xpose.msra.mxu0 %v303
        %326 = vmatprep.subr.mxu0 0.0
        %327 = vmatpush1.xpose.msra.mxu0 %v304
        %328 = vmatprep.subr.mxu0 0.0
        %329 = vmatpush1.xpose.msra.mxu0 %v305
        %330 = vmatprep.subr.mxu0 0.0
        %331 = vmatpush1.xpose.msra.mxu0 %v306
        %332 = vmatprep.subr.mxu0 0.0
        %333 = vmatpush1.xpose.msra.mxu0 %v307
        %334 = vmatprep.subr.mxu0 0.0
        %335 = vmatpush1.xpose.msra.mxu0 %v308
        %336 = vmatprep.subr.mxu0 0.0
        %337 = vmatpush1.xpose.msra.mxu0 %v309
        %338 = vmatprep.subr.mxu0 0.0
        %339 = vmatpush1.xpose.msra.mxu0 %v310
        %340 = vmatprep.subr.mxu0 0.0
        %341 = vmatpush1.xpose.msra.mxu0 %v311
        %342 = vmatprep.subr.mxu0 0.0
        %343 = vmatpush1.xpose.msra.mxu0 %v312
        %344 = vmatprep.subr.mxu0 0.0
        %345 = vmatpush1.xpose.msra.mxu0 %v313
        %346 = vmatprep.subr.mxu0 0.0
        %347 = vmatpush1.xpose.msra.mxu0 0.0
        %348 = vmatprep.subr.mxu0 0.0
        %349 = vmatpush1.xpose.msra.mxu0 0.0
        %350 = vmatprep.subr.mxu0 0.0
        %351 = vmatpush1.xpose.msra.mxu0 0.0
        %352 = vmatprep.subr.mxu0 0.0
        %353 = vmatpush1.xpose.msra.mxu0 0.0
        %354 = vmatprep.subr.mxu0 0.0
        %355 = vmatpush1.xpose.msra.mxu0 0.0
        %356 = vmatprep.subr.mxu0 0.0
        %357 = vmatpush1.xpose.msra.mxu0 0.0
        %358 = vmatprep.subr.mxu0 0.0
        %359 = vmatpush1.xpose.msra.mxu0 0.0
        %360 = vmatprep.subr.mxu0 0.0
        %361 = vmatpush1.xpose.msra.mxu0 0.0
        %362 = vmatprep.subr.mxu0 0.0
        %363 = vmatpush1.xpose.msra.mxu0 0.0
        %364 = vmatprep.subr.mxu0 0.0
        %365 = vmatpush1.xpose.msra.mxu0 0.0
        %366 = vmatprep.subr.mxu0 0.0
        %367 = vmatpush1.xpose.msra.mxu0 0.0
        %368 = vmatprep.subr.mxu0 0.0
        %369 = vmatpush1.xpose.msra.mxu0 0.0
        %370 = vmatprep.subr.mxu0 0.0
        %371 = vmatpush1.xpose.msra.mxu0 0.0
        %372 = vmatprep.subr.mxu0 0.0
        %373 = vmatpush1.xpose.msra.mxu0 0.0
        %374 = vmatprep.subr.mxu0 0.0
        %375 = vmatpush1.xpose.msra.mxu0 0.0
        %376 = vmatprep.subr.mxu0 0.0
        %377 = vmatpush1.xpose.msra.mxu0 0.0
        %378 = vmatprep.mubr.f32.mxu0 0.0
        %379 = vmatmul.mubr.f32.gmra.mrb[0].mxu0 %v294
        %v380 = vpop.f32.mrb[0].mxu0
        %v381 = vadd.f32 0.0, %v380
        %v382 = vpop.f32.mrb[0].mxu0
        %383 = vmatprep.mubr.f32.mxu0 0.0
        %384 = vmatmul.mubr.f32.gmra.mrb[0].mxu0 %v295
        %v385 = vpop.f32.mrb[0].mxu0
        %v386 = vadd.f32 0.0, %v385
        %v387 = vpop.f32.mrb[0].mxu0
        %388 = vmatprep.mubr.f32.mxu0 0.0
        %389 = vmatmul.mubr.f32.gmra.mrb[0].mxu0 %v296
        %v390 = vpop.f32.mrb[0].mxu0
        %v391 = vadd.f32 0.0, %v390
        %v392 = vpop.f32.mrb[0].mxu0
        %393 = vmatprep.mubr.f32.mxu0 0.0
        %394 = vmatmul.mubr.f32.gmra.mrb[0].mxu0 %v297
        %v395 = vpop.f32.mrb[0].mxu0
        %v396 = vadd.f32 0.0, %v395
        %v397 = vpop.f32.mrb[0].mxu0
        %398 = vdwg.mxu0
        %p399 = scmp.eq.s32.totalorder %s26, 0
        // Predicated region
        $region41: #{tpu_custom_call.1} parent=35 // pred_check
          %p400 = pneg %p399
        $region42: #{tpu_custom_call.1} parent=35 // pred_check_branch
          %402 = sbr.rel (%p400) target = $region44
        $region43: #{tpu_custom_call.1} parent=35 // pred_region
          %403 = vst [vmem:[%s273] sm:$0xff] %v381
          %404 = vst [vmem:[%s273 + $0x8] sm:$0xff] %v386
          %405 = vst [vmem:[%s273 + $0x10] sm:$0xff] %v391
          %406 = vst [vmem:[%s273 + $0x18] sm:$0xff] %v396
        $region44: #{tpu_custom_call.1} parent=35 // pred_fallthru
          _
        %p407 = scmp.gt.s32.totalorder %s26, 0
        // Predicated region
        $region45: #{tpu_custom_call.1} parent=35 // pred_check
          %p408 = pneg %p407
        $region46: #{tpu_custom_call.1} parent=35 // pred_check_branch
          %410 = sbr.rel (%p408) target = $region48
        $region47: #{tpu_custom_call.1} parent=35 // pred_region
          %v411 = vld [vmem:[%s273] sm:$0xff]
          %v412 = vld [vmem:[%s273 + $0x8] sm:$0xff]
          %v413 = vld [vmem:[%s273 + $0x10] sm:$0xff]
          %v414 = vld [vmem:[%s273 + $0x18] sm:$0xff]
          %v415 = vadd.f32 %v411, %v381
          %v416 = vadd.f32 %v412, %v386
          %v417 = vadd.f32 %v413, %v391
          %v418 = vadd.f32 %v414, %v396
          %419 = vst [vmem:[%s273] sm:$0xff] %v415
          %420 = vst [vmem:[%s273 + $0x8] sm:$0xff] %v416
          %421 = vst [vmem:[%s273 + $0x10] sm:$0xff] %v417
          %422 = vst [vmem:[%s273 + $0x18] sm:$0xff] %v418
        $region48: #{tpu_custom_call.1} parent=35 // pred_fallthru
          _
        // Predicated region
        $region49: #{tpu_custom_call.1} parent=35 // pred_check
          %p423 = pneg %p399
        $region50: #{tpu_custom_call.1} parent=35 // pred_check_branch
          %425 = sbr.rel (%p423) target = $region52
        $region51: #{tpu_custom_call.1} parent=35 // pred_region
          %v426 = vld [vmem:[%s273] sm:$0xff]
          %v427 = vld [vmem:[%s273 + $0x8] sm:$0xff]
          %v428 = vld [vmem:[%s273 + $0x10] sm:$0xff]
          %v429 = vld [vmem:[%s273 + $0x18] sm:$0xff]
          %v430 = vld [vmem:[%s288] sm:$0xff]
          %v431 = vld [vmem:[%s288 + $0x8] sm:$0xff]
          %v432 = vld [vmem:[%s288 + $0x10] sm:$0xff]
          %v433 = vld [vmem:[%s288 + $0x18] sm:$0xff]
          %435 = vset.pattern.permute.xlu0 0
          %436 = vperm.xlu0 %435, %v430
          %v437 = vpop.permute.xlu0 %436
          %440 = vset.pattern.permute.xlu0 0
          %441 = vperm.xlu0 %440, %v431
          %v442 = vpop.permute.xlu0 %441
          %445 = vset.pattern.permute.xlu0 0
          %446 = vperm.xlu0 %445, %v432
          %v447 = vpop.permute.xlu0 %446
          %450 = vset.pattern.permute.xlu0 0
          %451 = vperm.xlu0 %450, %v433
          %v452 = vpop.permute.xlu0 %451
          %v454 = vsub.f32 %v426, %v437
          %v455 = vsub.f32 %v427, %v442
          %v456 = vsub.f32 %v428, %v447
          %v457 = vsub.f32 %v429, %v452
          %v458 = vld [vmem:[%s292] sm:$0x1]
          %v460 = vlaneseq
          %v461 = vshrl.u32 %v460, 7
          %v462 = vsub.s32 0, %v461
          %v463 = vrot.slane %v458, %v462
          %v465 = vsub.f32 %v454, %v463
          %v466 = vsub.f32 %v455, %v463
          %v467 = vsub.f32 %v456, %v463
          %v468 = vsub.f32 %v457, %v463
          %469 = vst [vmem:[%s273] sm:$0xff] %v465
          %470 = vst [vmem:[%s273 + $0x8] sm:$0xff] %v466
          %471 = vst [vmem:[%s273 + $0x10] sm:$0xff] %v467
          %472 = vst [vmem:[%s273 + $0x18] sm:$0xff] %v468
        $region52: #{tpu_custom_call.1} parent=35 // pred_fallthru
          _
        %s473 = sand.u32 %s156, 1
        %s474 = scalar_lea.sflag [#allocation4], %s473
        %s475 = sand.u32 %s156, 1
        %s476 = smul.addr %s475, 32
        %s477 = scalar_lea.vmem [#allocation5], %s476
        // Predicated region
        $region53: #{tpu_custom_call.1} parent=35 // pred_check
          %p478 = pneg %p166
        $region54: #{tpu_custom_call.1} parent=35 // pred_check_branch
          %480 = sbr.rel (%p478) target = $region56
        $region55: #{tpu_custom_call.1} parent=35 // pred_region
          %s481 = smul.u32 4, %s24
          %s483 = ssub.s32 512, 512
          %484 = vsyncadd %s474, %s483
          %s485 = sadd.s32 %s25, %s481
          %s486 = smul.addr %s485, 128
          %s487 = scalar_lea.hbm %s4, %s486
          %s488 = sshll.u32 %s477, 4
          %s489 = int_to_ptr.vmem [resolvable:$true] %s488
          %494 = dma.vmem_to_hbm [thread:$0]  %s489, 512, %s487, %s474, 128, 128, 8
        $region56: #{tpu_custom_call.1} parent=35 // pred_fallthru
          _
      $region36: #{tpu_custom_call.1} parent=5 // pred_fallthru
        _
      %p495 = scmp.le.s32.totalorder 2, %s14
      // Predicated region
      $region57: #{tpu_custom_call.1} parent=5 // pred_check
        %p496 = pneg %p495
      $region58: #{tpu_custom_call.1} parent=5 // pred_check_branch
        %498 = sbr.rel (%p496) target = $region60
      $region59: #{tpu_custom_call.1} parent=5 // pred_region
        %s499 = ssub.s32 %s14, 2
        // Predicated region
        $region61: #{tpu_custom_call.1} parent=59 // pred_check
          %p500 = pneg %p172
        $region62: #{tpu_custom_call.1} parent=59 // pred_check_branch
          %502 = sbr.rel (%p500) target = $region64
        $region63: #{tpu_custom_call.1} parent=59 // pred_region
          %s503 = sand.u32 %s157, 1
          %s504 = scalar_lea.sflag [#allocation4], %s503
          %s505 = sand.u32 %s157, 1
          %s506 = smul.addr %s505, 32
          %s507 = scalar_lea.vmem [#allocation5], %s506
          %508 = dma.done %s504, 512
        $region64: #{tpu_custom_call.1} parent=59 // pred_fallthru
          _
      $region60: #{tpu_custom_call.1} parent=5 // pred_fallthru
        _
    $region6: #{tpu_custom_call.1} parent=1 // loop_footer
      %s18 = sadd.s32 1, %s14
    $region7: #{tpu_custom_call.1} parent=1 // loop_footer_branch
      %13 = sbr.rel target = $region3
    $region8: #{tpu_custom_call.1} parent=1 // loop_exit
      _
    %509 = vsyncpa [#allocation3], 1
    %s510 = scalar_lea.sflag [#allocation3], 1
    %511 = vsyncpa %s510, 1
    %512 = vsyncpa [#allocation4], 1
    %s513 = scalar_lea.sflag [#allocation4], 1
    %514 = vsyncpa %s513, 1

</llo_original>
